<compile_context>
chip_gen: v7x
topology: tpu7x:2x2x1
jax: 0.10.0
libtpu: 0.0.40
codegen_flags: <defaults>
</compile_context>

<pallas_src>
import functools

import jax
import jax.numpy as jnp
from jax.experimental import pallas as pl
from jax.experimental.pallas import tpu as pltpu


# ----------------------------------------------------------------------------
# Pass 1: global-average-pool (spatial sum, f32 accumulation), tiled over HW.
# x block: (1, C, hw_tile)  ->  pooled-sum block: (1, C, 1)
# ----------------------------------------------------------------------------
def _pool_kernel(x_ref, sum_ref, *, hw, hw_tile):
    t = pl.program_id(1)

    @pl.when(t == 0)
    def _():
        sum_ref[...] = jnp.zeros_like(sum_ref)

    x = x_ref[...]  # storage dtype; no full-tile f32 copy
    if hw % hw_tile != 0:
        # ragged last spatial tile: mask out-of-bounds lanes before summing
        lane = jax.lax.broadcasted_iota(jnp.int32, x.shape, dimension=2)
        x = jnp.where(t * hw_tile + lane < hw, x, jnp.zeros_like(x))

    # lane-axis (spatial) reduce, accumulated in f32
    sum_ref[...] += jnp.sum(x, axis=-1, keepdims=True, dtype=jnp.float32)


# ----------------------------------------------------------------------------
# Pass 2: tiny batched excitation MLP: s = sigmoid(relu(mean @ W1 + b1) @ W2 + b2)
# Runs once on the full (B, C) pooled matrix (grid-less, everything in VMEM).
# ----------------------------------------------------------------------------
def _fc_kernel(pooled_ref, w1_ref, b1_ref, w2_ref, b2_ref, s_ref, *, inv_hw):
    p = pooled_ref[...] * inv_hw  # (B, C) mean, f32
    h = jnp.dot(p, w1_ref[...], preferred_element_type=jnp.float32) + b1_ref[...]
    h = jnp.maximum(h, 0.0)
    z = jnp.dot(h, w2_ref[...], preferred_element_type=jnp.float32) + b2_ref[...]
    s_ref[...] = jax.nn.sigmoid(z)


# ----------------------------------------------------------------------------
# Pass 3: channel-wise rescale, tiled over (batch, spatial).  Lane-dense stores.
# x block: (1, C, hw_tile), s block: (1, C, 1) broadcast over lanes.
# ----------------------------------------------------------------------------
def _scale_kernel(x_ref, s_ref, o_ref):
    o_ref[...] = x_ref[...] * s_ref[...].astype(x_ref.dtype)


def _pick_hw_tile(hw, max_tile):
    """Spatial tile: multiple of 128 (lane-dense) or the full extent."""
    if hw <= max_tile:
        return hw
    base = (max_tile // 128) * 128
    if base <= 0:
        return hw
    # prefer a tile that divides HW exactly (no ragged edge)
    for t in range(base, 0, -128):
        if hw % t == 0:
            return t
    return base  # ragged last tile, masked in the pool kernel


def attention_block(x_nchw, fc1_w, fc1_b, fc2_w, fc2_b, *, max_hw_tile=2048):
    """x_nchw: [B, C, H, W] (PyTorch layout). fc*_w: [out, in, 1, 1], fc*_b: [out]."""
    B, C, H, W = x_nchw.shape
    assert H == W, "avg_pool2d(x, x.size(2)) assumes square spatial dims"
    HW = H * W
    Cr = fc1_w.shape[0]

    hw_tile = _pick_hw_tile(HW, max_hw_tile)
    n_hw = pl.cdiv(HW, hw_tile)

    # Native layout: reshape only (free bitcast), no transpose of the big tensor.
    x3 = x_nchw.reshape(B, C, HW)

    # ---- pass 1: pooled spatial sums (B, C, 1) in f32
    pooled_sum = pl.pallas_call(
        functools.partial(_pool_kernel, hw=HW, hw_tile=hw_tile),
        out_shape=jax.ShapeDtypeStruct((B, C, 1), jnp.float32),
        grid=(B, n_hw),
        in_specs=[pl.BlockSpec((1, C, hw_tile), lambda b, t: (b, 0, t))],
        out_specs=pl.BlockSpec((1, C, 1), lambda b, t: (b, 0, 0)),
        compiler_params=pltpu.CompilerParams(
            dimension_semantics=("parallel", "arbitrary")),
    )(x3)

    # ---- pass 2: excitation MLP, batched over B (tiny)
    w1 = jnp.transpose(fc1_w.reshape(Cr, C), (1, 0))  # (C, Cr)
    w2 = jnp.transpose(fc2_w.reshape(C, Cr), (1, 0))  # (Cr, C)
    b1 = fc1_b.reshape(1, Cr)
    b2 = fc2_b.reshape(1, C)
    s2d = pl.pallas_call(
        functools.partial(_fc_kernel, inv_hw=float(1.0 / HW)),
        out_shape=jax.ShapeDtypeStruct((B, C), jnp.float32),
    )(pooled_sum.reshape(B, C), w1, b1, w2, b2)

    # ---- pass 3: x * s, tiled, both grid axes parallel (megacore-friendly)
    out3 = pl.pallas_call(
        _scale_kernel,
        out_shape=jax.ShapeDtypeStruct((B, C, HW), x_nchw.dtype),
        grid=(B, n_hw),
        in_specs=[
            pl.BlockSpec((1, C, hw_tile), lambda b, t: (b, 0, t)),
            pl.BlockSpec((1, C, 1), lambda b, t: (b, 0, 0)),
        ],
        out_specs=pl.BlockSpec((1, C, hw_tile), lambda b, t: (b, 0, t)),
        compiler_params=pltpu.CompilerParams(
            dimension_semantics=("parallel", "parallel")),
    )(x3, s2d.reshape(B, C, 1))
    # TODO(synk): optionally alias x -> out (input_output_aliases) when the caller
    # can donate x; skipped here because the demo re-reads x for the reference.

    return out3.reshape(B, C, H, W)


def _reference(x, fc1_w, fc1_b, fc2_w, fc2_b):
    # pure-JAX reference of the PyTorch forward (NCHW)
    B, C, H, W = x.shape
    Cr = fc1_w.shape[0]
    w = jnp.mean(x, axis=(2, 3))                               # (B, C)
    h = jnp.maximum(w @ fc1_w.reshape(Cr, C).T + fc1_b, 0.0)   # (B, Cr)
    s = jax.nn.sigmoid(h @ fc2_w.reshape(C, Cr).T + fc2_b)     # (B, C)
    return x * s[:, :, None, None]


if __name__ == "__main__":
    key = jax.random.PRNGKey(0)
    B, C, H, W = 2, 64, 16, 16
    reduction_ratio = 16
    Cr = C // reduction_ratio

    k_x, k_w1, k_b1, k_w2, k_b2 = jax.random.split(key, 5)
    x = jax.random.normal(k_x, (B, C, H, W), dtype=jnp.float32)
    fc1_w = 0.1 * jax.random.normal(k_w1, (Cr, C, 1, 1), dtype=jnp.float32)
    fc1_b = 0.1 * jax.random.normal(k_b1, (Cr,), dtype=jnp.float32)
    fc2_w = 0.1 * jax.random.normal(k_w2, (C, Cr, 1, 1), dtype=jnp.float32)
    fc2_b = 0.1 * jax.random.normal(k_b2, (C,), dtype=jnp.float32)

    fn = jax.jit(attention_block, static_argnames=("max_hw_tile",))
    ref = _reference(x, fc1_w, fc1_b, fc2_w, fc2_b)

    # multi-tile spatial path (2 lane-dense tiles of 128)
    out = jax.block_until_ready(
        fn(x, fc1_w, fc1_b, fc2_w, fc2_b, max_hw_tile=128))
    assert out.shape == (B, C, H, W)
    assert jnp.allclose(out, ref, atol=1e-5, rtol=1e-5), "mismatch (tiled path)"

    # single full-spatial tile path (default tile cap)
    out2 = jax.block_until_ready(fn(x, fc1_w, fc1_b, fc2_w, fc2_b))
    assert jnp.allclose(out2, ref, atol=1e-5, rtol=1e-5), "mismatch (full-tile path)"

    print("KERNEL_OK")
</pallas_src>

<mosaic_0001>
module attributes {stable_mosaic.version = 11 : i64} {
  func.func @_pool_kernel(%arg0: i32, %arg1: i32, %arg2: memref<1x64x128xf32, #tpu.memory_space<vmem>>, %arg3: memref<1x64x1xf32, #tpu.memory_space<vmem>>) attributes {dimension_semantics = [#tpu.dimension_semantics<parallel>, #tpu.dimension_semantics<arbitrary>], iteration_bounds = array<i64: 2, 2>, scalar_prefetch = 0 : i64, scratch_operands = 0 : i64, tpu.core_type = #tpu.core_type<tc>, window_params = [{transform_indices = @transform_0, window_bounds = array<i64: 1, 64, 128>}, {transform_indices = @transform_1, window_bounds = array<i64: 1, 64, 1>}]} {
    %c0_i32 = arith.constant 0 : i32
    %0 = arith.cmpi eq, %arg1, %c0_i32 : i32
    %1 = arith.extui %0 : i1 to i32
    %c0_i32_0 = arith.constant 0 : i32
    %2 = arith.cmpi ne, %1, %c0_i32_0 : i32
    scf.if %2 {
      %cst_9 = arith.constant 0.000000e+00 : f32
      %9 = vector.broadcast %cst_9 : f32 to vector<1x64x1xf32>
      %c0_10 = arith.constant 0 : index
      %c0_11 = arith.constant 0 : index
      %c0_12 = arith.constant 0 : index
      %10 = vector.load %arg3[%c0_10, %c0_11, %c0_12] : memref<1x64x1xf32, #tpu.memory_space<vmem>>, vector<1x64x1xf32>
      tpu.vector_store %arg3[%c0_10, %c0_11, %c0_12], %9 {strides = array<i32>} : memref<1x64x1xf32, #tpu.memory_space<vmem>>, vector<1x64x1xf32>,
    } else {
    }
    %c0 = arith.constant 0 : index
    %c0_1 = arith.constant 0 : index
    %c0_2 = arith.constant 0 : index
    %3 = vector.load %arg2[%c0, %c0_1, %c0_2] : memref<1x64x128xf32, #tpu.memory_space<vmem>>, vector<1x64x128xf32>
    %c0_3 = arith.constant 0 : index
    %c0_4 = arith.constant 0 : index
    %c0_5 = arith.constant 0 : index
    %4 = vector.load %arg3[%c0_3, %c0_4, %c0_5] : memref<1x64x1xf32, #tpu.memory_space<vmem>>, vector<1x64x1xf32>
    %cst = arith.constant dense<0.000000e+00> : vector<1x64xf32>
    %5 = vector.multi_reduction <add>, %3, %cst [2] : vector<1x64x128xf32> to vector<1x64xf32>
    %6 = vector.shape_cast %5 : vector<1x64xf32> to vector<1x64x1xf32>
    %7 = arith.addf %4, %6 : vector<1x64x1xf32>
    %c0_6 = arith.constant 0 : index
    %c0_7 = arith.constant 0 : index
    %c0_8 = arith.constant 0 : index
    %8 = vector.load %arg3[%c0_6, %c0_7, %c0_8] : memref<1x64x1xf32, #tpu.memory_space<vmem>>, vector<1x64x1xf32>
    tpu.vector_store %arg3[%c0_6, %c0_7, %c0_8], %7 {strides = array<i32>} : memref<1x64x1xf32, #tpu.memory_space<vmem>>, vector<1x64x1xf32>,
    return
  }
  func.func @transform_0(%arg0: i32, %arg1: i32) -> (i32, i32, i32) {
    %c0_i32 = arith.constant 0 : i32
    %c0_i32_0 = arith.constant 0 : i32
    return %arg0, %c0_i32, %arg1 : i32, i32, i32
  }
  func.func @transform_1(%arg0: i32, %arg1: i32) -> (i32, i32, i32) {
    %c0_i32 = arith.constant 0 : i32
    %c0_i32_0 = arith.constant 0 : i32
    %c0_i32_1 = arith.constant 0 : i32
    return %arg0, %c0_i32, %c0_i32_0 : i32, i32, i32
  }
}

module attributes {stable_mosaic.version = 11 : i64} {
  func.func @_fc_kernel(%arg0: memref<2x64xf32, #tpu.memory_space<vmem>>, %arg1: memref<64x4xf32, #tpu.memory_space<vmem>>, %arg2: memref<1x4xf32, #tpu.memory_space<vmem>>, %arg3: memref<4x64xf32, #tpu.memory_space<vmem>>, %arg4: memref<1x64xf32, #tpu.memory_space<vmem>>, %arg5: memref<2x64xf32, #tpu.memory_space<vmem>>) attributes {dimension_semantics = [], scalar_prefetch = 0 : i64, scratch_operands = 0 : i64, tpu.core_type = #tpu.core_type<tc>} {
    %c0 = arith.constant 0 : index
    %c0_0 = arith.constant 0 : index
    %0 = vector.load %arg0[%c0, %c0_0] : memref<2x64xf32, #tpu.memory_space<vmem>>, vector<2x64xf32>
    %cst = arith.constant 3.906250e-03 : f32
    %1 = vector.broadcast %cst : f32 to vector<2x64xf32>
    %2 = arith.mulf %0, %1 : vector<2x64xf32>
    %c0_1 = arith.constant 0 : index
    %c0_2 = arith.constant 0 : index
    %3 = vector.load %arg1[%c0_1, %c0_2] : memref<64x4xf32, #tpu.memory_space<vmem>>, vector<64x4xf32>
    %cst_3 = arith.constant dense<0.000000e+00> : vector<2x4xf32>
    %4 = tpu.matmul %2, %3, %cst_3 {dimension_numbers = #tpu.dot_dimension_numbers<[1], [0], [0], [1], [0, 0, 1, 1], [], []>} : vector<2x64xf32>, vector<64x4xf32>, vector<2x4xf32> -> vector<2x4xf32>
    %c0_4 = arith.constant 0 : index
    %c0_5 = arith.constant 0 : index
    %5 = vector.load %arg2[%c0_4, %c0_5] : memref<1x4xf32, #tpu.memory_space<vmem>>, vector<1x4xf32>
    %6 = vector.broadcast %5 : vector<1x4xf32> to vector<2x4xf32>
    %7 = arith.addf %4, %6 : vector<2x4xf32>
    %cst_6 = arith.constant 0.000000e+00 : f32
    %8 = vector.broadcast %cst_6 : f32 to vector<2x4xf32>
    %9 = arith.maximumf %7, %8 : vector<2x4xf32>
    %c0_7 = arith.constant 0 : index
    %c0_8 = arith.constant 0 : index
    %10 = vector.load %arg3[%c0_7, %c0_8] : memref<4x64xf32, #tpu.memory_space<vmem>>, vector<4x64xf32>
    %cst_9 = arith.constant dense<0.000000e+00> : vector<2x64xf32>
    %11 = tpu.matmul %9, %10, %cst_9 {dimension_numbers = #tpu.dot_dimension_numbers<[1], [0], [0], [1], [0, 0, 1, 1], [], []>} : vector<2x4xf32>, vector<4x64xf32>, vector<2x64xf32> -> vector<2x64xf32>
    %c0_10 = arith.constant 0 : index
    %c0_11 = arith.constant 0 : index
    %12 = vector.load %arg4[%c0_10, %c0_11] : memref<1x64xf32, #tpu.memory_space<vmem>>, vector<1x64xf32>
    %13 = vector.broadcast %12 : vector<1x64xf32> to vector<2x64xf32>
    %14 = arith.addf %11, %13 : vector<2x64xf32>
    %15 = arith.negf %14 : vector<2x64xf32>
    %16 = math.exp %15 : vector<2x64xf32>
    %cst_12 = arith.constant 1.000000e+00 : f32
    %17 = vector.broadcast %cst_12 : f32 to vector<2x64xf32>
    %18 = arith.addf %17, %16 : vector<2x64xf32>
    %19 = arith.divf %17, %18 : vector<2x64xf32>
    %c0_13 = arith.constant 0 : index
    %c0_14 = arith.constant 0 : index
    %20 = vector.load %arg5[%c0_13, %c0_14] : memref<2x64xf32, #tpu.memory_space<vmem>>, vector<2x64xf32>
    tpu.vector_store %arg5[%c0_13, %c0_14], %19 {strides = array<i32>} : memref<2x64xf32, #tpu.memory_space<vmem>>, vector<2x64xf32>,
    return
  }
}

module attributes {stable_mosaic.version = 11 : i64} {
  func.func @_scale_kernel(%arg0: i32, %arg1: i32, %arg2: memref<1x64x128xf32, #tpu.memory_space<vmem>>, %arg3: memref<1x64x1xf32, #tpu.memory_space<vmem>>, %arg4: memref<1x64x128xf32, #tpu.memory_space<vmem>>) attributes {dimension_semantics = [#tpu.dimension_semantics<parallel>, #tpu.dimension_semantics<parallel>], iteration_bounds = array<i64: 2, 2>, scalar_prefetch = 0 : i64, scratch_operands = 0 : i64, tpu.core_type = #tpu.core_type<tc>, window_params = [{transform_indices = @transform_0, window_bounds = array<i64: 1, 64, 128>}, {transform_indices = @transform_1, window_bounds = array<i64: 1, 64, 1>}, {transform_indices = @transform_2, window_bounds = array<i64: 1, 64, 128>}]} {
    %c0 = arith.constant 0 : index
    %c0_0 = arith.constant 0 : index
    %c0_1 = arith.constant 0 : index
    %0 = vector.load %arg2[%c0, %c0_0, %c0_1] : memref<1x64x128xf32, #tpu.memory_space<vmem>>, vector<1x64x128xf32>
    %c0_2 = arith.constant 0 : index
    %c0_3 = arith.constant 0 : index
    %c0_4 = arith.constant 0 : index
    %1 = vector.load %arg3[%c0_2, %c0_3, %c0_4] : memref<1x64x1xf32, #tpu.memory_space<vmem>>, vector<1x64x1xf32>
    %2 = vector.broadcast %1 : vector<1x64x1xf32> to vector<1x64x128xf32>
    %3 = arith.mulf %0, %2 : vector<1x64x128xf32>
    %c0_5 = arith.constant 0 : index
    %c0_6 = arith.constant 0 : index
    %c0_7 = arith.constant 0 : index
    %4 = vector.load %arg4[%c0_5, %c0_6, %c0_7] : memref<1x64x128xf32, #tpu.memory_space<vmem>>, vector<1x64x128xf32>
    tpu.vector_store %arg4[%c0_5, %c0_6, %c0_7], %3 {strides = array<i32>} : memref<1x64x128xf32, #tpu.memory_space<vmem>>, vector<1x64x128xf32>,
    return
  }
  func.func @transform_0(%arg0: i32, %arg1: i32) -> (i32, i32, i32) {
    %c0_i32 = arith.constant 0 : i32
    %c0_i32_0 = arith.constant 0 : i32
    return %arg0, %c0_i32, %arg1 : i32, i32, i32
  }
  func.func @transform_1(%arg0: i32, %arg1: i32) -> (i32, i32, i32) {
    %c0_i32 = arith.constant 0 : i32
    %c0_i32_0 = arith.constant 0 : i32
    %c0_i32_1 = arith.constant 0 : i32
    return %arg0, %c0_i32, %c0_i32_0 : i32, i32, i32
  }
  func.func @transform_2(%arg0: i32, %arg1: i32) -> (i32, i32, i32) {
    %c0_i32 = arith.constant 0 : i32
    %c0_i32_0 = arith.constant 0 : i32
    return %arg0, %c0_i32, %arg1 : i32, i32, i32
  }
}

</mosaic_0001>

<llo_original>
// kernel: attention_block.3
$region0: #{attention_block.3}
  #allocation0 [shape = 'u32[]', space=smem, size = 0x4, offset = 0x4, fixed_abs, tag = 'smem constant byte address 0x4 - core index']
  #allocation1 [shape = 'u32[144,128]{1,0:T(1,128)}', space=vmem, size = 0x12000, scoped, tag = 'internal scratch']
  %s0 = inlined_call_operand.vmem [shape: f32[2,64,256], index: 0, kind: input, shape index: {}]
  %s1 = inlined_call_operand.vmem [shape: f32[2,64,1], index: 1, kind: output, shape index: {}]
  %s2 = sld [smem:[#allocation0]]
  $region79: #{attention_block.3} parent=0
    _
  %s4 = ssub.s32 1, %s2
  %s5 = scalar_select 0, %s4, %s2
  $region1: #{attention_block.3} parent=0
    #allocation2 [shape = 'u8[65536]{0}', space=vmem, size = 0x10000, scoped, tag = 'input window, operand 0']
    loop: start=0, step=1, limit=6
    $region2: #{attention_block.3} parent=1 // loop_pre_header
      _
    $region3: #{attention_block.3} parent=1 // loop_header
      %s7 = sphi 0, %s11
      %p8 = scmp.ge.s32.totalorder %s7, 6
      %s14 = sphi 0, %s26
      %s15 = sphi 0, %s22
      %s16 = sphi 0, %s14
      %s17 = sphi 0, %s15
      %s18 = sphi 0, %s16
      %s19 = sphi 0, %s17
      %s31 = sphi 0, %s33
      %s34 = sphi 0, %s31
      %s35 = sphi 0, %s34
      %s51 = sphi 0, %s35
      %s57 = sphi 0, %s59
      %s60 = sphi 0, %s57
      %s61 = sphi 0, %s60
      %s77 = sphi 0, %s61
    $region4: #{attention_block.3} parent=1 // loop_header_branch
      %10 = sbr.rel (%p8) target = $region8
    $region5: #{attention_block.3} parent=1 // loop_body
      %s12 = ssub.s32 %s7, 1
      %s13 = ssub.s32 %s7, 2
      %s20 = sadd.s32 1, %s15
      %p21 = scmp.ge.s32.totalorder %s20, 2
      %s22 = scalar_select %p21, 0, %s20
      %s23 = sadd.s32 1, %s14
      %s24 = scalar_select %p21, %s23, %s14
      %p25 = scmp.ge.s32.totalorder %s24, 2
      %s26 = scalar_select %p25, 0, %s24
      %s27 = ssub.s32 %s14, %s26
      %s28 = ssub.s32 %s15, %s22
      %s29 = sor.u32 %s27, %s28
      %p30 = scmp.eq.s32.totalorder %s29, 0
      %s32 = sadd.s32 %s31, 1
      %s33 = scalar_select %p30, %s31, %s32
      %p36 = pneg %p30
      %p37 = scmp.eq.s32.totalorder %s7, 3
      %p38 = por %p36, %p37
      %p39 = scmp.ne.s32.totalorder %s31, %s34
      %p40 = scmp.eq.s32.totalorder %s7, 0
      %p41 = por %p39, %p40
      %p42 = scmp.ne.s32.totalorder %s31, %s34
      %p43 = scmp.eq.s32.totalorder %s12, 3
      %p44 = por %p42, %p43
      %p45 = scmp.ne.s32.totalorder %s34, %s35
      %p46 = scmp.eq.s32.totalorder %s12, 0
      %p47 = por %p45, %p46
      %p48 = scmp.ne.s32.totalorder %s34, %s35
      %p49 = scmp.eq.s32.totalorder %s13, 3
      %p50 = por %p48, %p49
      %p52 = scmp.ne.s32.totalorder %s35, %s51
      %p53 = scmp.eq.s32.totalorder %s13, 0
      %p54 = por %p52, %p53
      %s55 = ssub.s32 %s14, %s26
      %p56 = scmp.eq.s32.totalorder %s55, 0
      %s58 = sadd.s32 %s57, 1
      %s59 = scalar_select %p56, %s57, %s58
      %p62 = pneg %p56
      %p63 = scmp.eq.s32.totalorder %s7, 3
      %p64 = por %p62, %p63
      %p65 = scmp.ne.s32.totalorder %s57, %s60
      %p66 = scmp.eq.s32.totalorder %s7, 0
      %p67 = por %p65, %p66
      %p68 = scmp.ne.s32.totalorder %s57, %s60
      %p69 = scmp.eq.s32.totalorder %s12, 3
      %p70 = por %p68, %p69
      %p71 = scmp.ne.s32.totalorder %s60, %s61
      %p72 = scmp.eq.s32.totalorder %s12, 0
      %p73 = por %p71, %p72
      %p74 = scmp.ne.s32.totalorder %s60, %s61
      %p75 = scmp.eq.s32.totalorder %s13, 3
      %p76 = por %p74, %p75
      %p78 = scmp.ne.s32.totalorder %s61, %s77
      %p79 = scmp.eq.s32.totalorder %s13, 0
      %p80 = por %p78, %p79
      %p81 = scmp.le.s32.totalorder 1, %s7
      %p82 = scmp.lt.s32.totalorder %s7, 5
      %p83 = pnand %p81, %p82
      %p84 = pneg %p83
      // Predicated region
      $region9: #{attention_block.3} parent=5 // pred_check
        _
      $region10: #{attention_block.3} parent=5 // pred_check_branch
        %86 = sbr.rel (%p83) target = $region12
      $region11: #{attention_block.3} parent=5 // pred_region
        %s87 = ssub.s32 %s7, 1
      $region12: #{attention_block.3} parent=5 // pred_fallthru
        _
      %p88 = scmp.lt.s32.totalorder %s7, 4
      // Predicated region
      $region13: #{attention_block.3} parent=5 // pred_check
        %p89 = pneg %p88
      $region14: #{attention_block.3} parent=5 // pred_check_branch
        %91 = sbr.rel (%p89) target = $region16
      $region15: #{attention_block.3} parent=5 // pred_region
        // Predicated region
        $region17: #{attention_block.3} parent=15 // pred_check
          %p92 = pneg %p41
        $region18: #{attention_block.3} parent=15 // pred_check_branch
          %94 = sbr.rel (%p92) target = $region20
        $region19: #{attention_block.3} parent=15 // pred_region
          %s95 = sand.u32 %s31, 1
          %s96 = sand.u32 %s31, 1
          %s97 = smul.addr %s96, 64
          %s98 = scalar_lea.vmem [#allocation2], %s97
          %s99 = smul.addr %s14, 16
          %s100 = sadd.s32 %s15, %s99
          %s101 = smul.addr %s100, 8
          %s102 = scalar_lea.vmem %s0, %s101
          // Predicated region
          $region21: #{attention_block.3} parent=19 // pred_check
            _
          $region22: #{attention_block.3} parent=19 // pred_check_branch
            %104 = sbr.rel (0) target = $region24
          $region23: #{attention_block.3} parent=19 // pred_region
            // Predicated region
            $region25: #{attention_block.3} parent=23 // pred_check
              _
            $region26: #{attention_block.3} parent=23 // pred_check_branch
              %106 = sbr.rel (0) target = $region28
            $region27: #{attention_block.3} parent=23 // pred_region
              // Predicated region
              $region40: #{attention_block.3} parent=27 // pred_check
                _
              $region41: #{attention_block.3} parent=27 // pred_check_branch
                %135 = sbr.rel (0) target = $region43
              $region42: #{attention_block.3} parent=27 // pred_region
                loop: start=0, step=1, limit=1
                $region44: #{attention_block.3} parent=42 // loop_pre_header
                  _
                $region45: #{attention_block.3} parent=42 // loop_header
                  %s137 = sphi 0, %s141
                  %p138 = scmp.ge.s32.totalorder %s137, 1
                  %s142 = sphi %s102, %s102
                  %s143 = sphi %s98, %s98
                $region46: #{attention_block.3} parent=42 // loop_header_branch
                  %140 = sbr.rel (%p138) target = $region50
                $region47: #{attention_block.3} parent=42 // loop_body
                  %v144 = vld [vmem:[%s142] sm:$0xff]
                  %145 = vst [vmem:[%s143] sm:$0xff] %v144
                  %v146 = vld [vmem:[%s142 + $0x10] sm:$0xff]
                  %147 = vst [vmem:[%s143 + $0x8] sm:$0xff] %v146
                  %v148 = vld [vmem:[%s142 + $0x20] sm:$0xff]
                  %149 = vst [vmem:[%s143 + $0x10] sm:$0xff] %v148
                  %v150 = vld [vmem:[%s142 + $0x30] sm:$0xff]
                  %151 = vst [vmem:[%s143 + $0x18] sm:$0xff] %v150
                  %v152 = vld [vmem:[%s142 + $0x40] sm:$0xff]
                  %153 = vst [vmem:[%s143 + $0x20] sm:$0xff] %v152
                  %v154 = vld [vmem:[%s142 + $0x50] sm:$0xff]
                  %155 = vst [vmem:[%s143 + $0x28] sm:$0xff] %v154
                  %v156 = vld [vmem:[%s142 + $0x60] sm:$0xff]
                  %157 = vst [vmem:[%s143 + $0x30] sm:$0xff] %v156
                  %v158 = vld [vmem:[%s142 + $0x70] sm:$0xff]
                  %159 = vst [vmem:[%s143 + $0x38] sm:$0xff] %v158
                $region48: #{attention_block.3} parent=42 // loop_footer
                  %s141 = sadd.s32 1, %s137
                $region49: #{attention_block.3} parent=42 // loop_footer_branch
                  %136 = sbr.rel target = $region45
                $region50: #{attention_block.3} parent=42 // loop_exit
                  _
              $region43: #{attention_block.3} parent=27 // pred_fallthru
                _
              // Predicated region
              $region51: #{attention_block.3} parent=27 // pred_check
                _
              $region52: #{attention_block.3} parent=27 // pred_check_branch
                %161 = sbr.rel target = $region54
              $region53: #{attention_block.3} parent=27 // pred_region
                _
              $region54: #{attention_block.3} parent=27 // pred_fallthru
                _
            $region28: #{attention_block.3} parent=23 // pred_fallthru
              _
            // Predicated region
            $region29: #{attention_block.3} parent=23 // pred_check
              _
            $region30: #{attention_block.3} parent=23 // pred_check_branch
              %108 = sbr.rel target = $region32
            $region31: #{attention_block.3} parent=23 // pred_region
              loop: start=0, step=1, limit=1
              $region33: #{attention_block.3} parent=31 // loop_pre_header
                _
              $region34: #{attention_block.3} parent=31 // loop_header
                %s111 = sphi 0, %s115
                %p112 = scmp.ge.s32.totalorder %s111, 1
                %s116 = sphi %s102, %s102
                %s117 = sphi %s98, %s98
              $region35: #{attention_block.3} parent=31 // loop_header_branch
                %114 = sbr.rel (%p112) target = $region39
              $region36: #{attention_block.3} parent=31 // loop_body
                %v118 = vld [vmem:[%s116] sm:$0xff]
                %119 = vst [vmem:[%s117] sm:$0xff] %v118
                %v120 = vld [vmem:[%s116 + $0x10] sm:$0xff]
                %121 = vst [vmem:[%s117 + $0x8] sm:$0xff] %v120
                %v122 = vld [vmem:[%s116 + $0x20] sm:$0xff]
                %123 = vst [vmem:[%s117 + $0x10] sm:$0xff] %v122
                %v124 = vld [vmem:[%s116 + $0x30] sm:$0xff]
                %125 = vst [vmem:[%s117 + $0x18] sm:$0xff] %v124
                %v126 = vld [vmem:[%s116 + $0x40] sm:$0xff]
                %127 = vst [vmem:[%s117 + $0x20] sm:$0xff] %v126
                %v128 = vld [vmem:[%s116 + $0x50] sm:$0xff]
                %129 = vst [vmem:[%s117 + $0x28] sm:$0xff] %v128
                %v130 = vld [vmem:[%s116 + $0x60] sm:$0xff]
                %131 = vst [vmem:[%s117 + $0x30] sm:$0xff] %v130
                %v132 = vld [vmem:[%s116 + $0x70] sm:$0xff]
                %133 = vst [vmem:[%s117 + $0x38] sm:$0xff] %v132
              $region37: #{attention_block.3} parent=31 // loop_footer
                %s115 = sadd.s32 1, %s111
              $region38: #{attention_block.3} parent=31 // loop_footer_branch
                %110 = sbr.rel target = $region34
              $region39: #{attention_block.3} parent=31 // loop_exit
                _
            $region32: #{attention_block.3} parent=23 // pred_fallthru
              _
          $region24: #{attention_block.3} parent=19 // pred_fallthru
            _
          %162 = vnop
        $region20: #{attention_block.3} parent=15 // pred_fallthru
          _
      $region16: #{attention_block.3} parent=5 // pred_fallthru
        _
      %p163 = scmp.le.s32.totalorder 1, %s7
      %p164 = scmp.lt.s32.totalorder %s7, 5
      %p165 = pnand %p163, %p164
      %p166 = pneg %p165
      // Predicated region
      $region55: #{attention_block.3} parent=5 // pred_check
        _
      $region56: #{attention_block.3} parent=5 // pred_check_branch
        %168 = sbr.rel (%p165) target = $region58
      $region57: #{attention_block.3} parent=5 // pred_region
        %s169 = ssub.s32 %s7, 1
        %s170 = sand.u32 %s34, 1
        %s171 = sand.u32 %s34, 1
        %s172 = smul.addr %s171, 64
        %s173 = scalar_lea.vmem [#allocation2], %s172
        // Predicated region
        $region59: #{attention_block.3} parent=57 // pred_check
          %p174 = pneg %p47
        $region60: #{attention_block.3} parent=57 // pred_check_branch
          %176 = sbr.rel (%p174) target = $region62
        $region61: #{attention_block.3} parent=57 // pred_region
          _
        $region62: #{attention_block.3} parent=57 // pred_fallthru
          _
        %s177 = sand.u32 %s34, 1
        %s178 = sand.u32 %s34, 1
        %s179 = smul.addr %s178, 64
        %s180 = scalar_lea.vmem [#allocation2], %s179
        %p181 = pneg %p47
        %p182 = pneg %p44
        %p183 = pneg %p73
        %p184 = pneg %p70
        %p185 = scmp.lt.s32.totalorder %s16, 1
        %s186 = scalar_select %p185, %s16, 1
        %s187 = smul.addr %s186, 8
        %s188 = smul.addr %s187, 8
        %s189 = scalar_lea.vmem %s1, %s188
        %p190 = scmp.lt.s32.totalorder %s16, 1
        %s191 = scalar_select %p190, %s16, 1
        %s192 = smul.addr %s191, 8
        %s193 = smul.addr %s192, 8
        %s194 = scalar_lea.vmem %s1, %s193
        %p195 = scmp.eq.s32.totalorder %s17, 0
        // Predicated region
        $region63: #{attention_block.3} parent=57 // pred_check
          %p196 = pneg %p195
        $region64: #{attention_block.3} parent=57 // pred_check_branch
          %198 = sbr.rel (%p196) target = $region66
        $region65: #{attention_block.3} parent=57 // pred_region
          %vm199 = vcmask 7168
          %200 = vst.msk [vmem:[%s194] sm:$0xff] %vm199, 0.0
          %201 = vst.msk [vmem:[%s194 + $0x8] sm:$0xff] %vm199, 0.0
          %202 = vst.msk [vmem:[%s194 + $0x10] sm:$0xff] %vm199, 0.0
          %203 = vst.msk [vmem:[%s194 + $0x18] sm:$0xff] %vm199, 0.0
          %204 = vst.msk [vmem:[%s194 + $0x20] sm:$0xff] %vm199, 0.0
          %205 = vst.msk [vmem:[%s194 + $0x28] sm:$0xff] %vm199, 0.0
          %206 = vst.msk [vmem:[%s194 + $0x30] sm:$0xff] %vm199, 0.0
          %207 = vst.msk [vmem:[%s194 + $0x38] sm:$0xff] %vm199, 0.0
        $region66: #{attention_block.3} parent=57 // pred_fallthru
          _
        %v208 = vld [vmem:[%s173] sm:$0xff]
        %v209 = vld [vmem:[%s173 + $0x8] sm:$0xff]
        %v210 = vld [vmem:[%s173 + $0x10] sm:$0xff]
        %v211 = vld [vmem:[%s173 + $0x18] sm:$0xff]
        %v212 = vld [vmem:[%s173 + $0x20] sm:$0xff]
        %v213 = vld [vmem:[%s173 + $0x28] sm:$0xff]
        %v214 = vld [vmem:[%s173 + $0x30] sm:$0xff]
        %v215 = vld [vmem:[%s173 + $0x38] sm:$0xff]
        %v216 = vld [vmem:[%s194] sm:$0xff]
        %v217 = vld [vmem:[%s194 + $0x8] sm:$0xff]
        %v218 = vld [vmem:[%s194 + $0x10] sm:$0xff]
        %v219 = vld [vmem:[%s194 + $0x18] sm:$0xff]
        %v220 = vld [vmem:[%s194 + $0x20] sm:$0xff]
        %v221 = vld [vmem:[%s194 + $0x28] sm:$0xff]
        %v222 = vld [vmem:[%s194 + $0x30] sm:$0xff]
        %v223 = vld [vmem:[%s194 + $0x38] sm:$0xff]
        %224 = vadd.xlane.f32.xlu0 %v208
        %v225 = vpop.xlane.xlu0 %224
        %226 = vadd.xlane.f32.xlu0 %v209
        %v227 = vpop.xlane.xlu0 %226
        %228 = vadd.xlane.f32.xlu0 %v210
        %v229 = vpop.xlane.xlu0 %228
        %230 = vadd.xlane.f32.xlu0 %v211
        %v231 = vpop.xlane.xlu0 %230
        %232 = vadd.xlane.f32.xlu0 %v212
        %v233 = vpop.xlane.xlu0 %232
        %234 = vadd.xlane.f32.xlu0 %v213
        %v235 = vpop.xlane.xlu0 %234
        %236 = vadd.xlane.f32.xlu0 %v214
        %v237 = vpop.xlane.xlu0 %236
        %238 = vadd.xlane.f32.xlu0 %v215
        %v239 = vpop.xlane.xlu0 %238
        %v240 = vadd.f32 %v216, %v225
        %v241 = vadd.f32 %v217, %v227
        %v242 = vadd.f32 %v218, %v229
        %v243 = vadd.f32 %v219, %v231
        %v244 = vadd.f32 %v220, %v233
        %v245 = vadd.f32 %v221, %v235
        %v246 = vadd.f32 %v222, %v237
        %v247 = vadd.f32 %v223, %v239
        %vm248 = vcmask 7168
        %249 = vst.msk [vmem:[%s194] sm:$0xff] %vm248, %v240
        %250 = vst.msk [vmem:[%s194 + $0x8] sm:$0xff] %vm248, %v241
        %251 = vst.msk [vmem:[%s194 + $0x10] sm:$0xff] %vm248, %v242
        %252 = vst.msk [vmem:[%s194 + $0x18] sm:$0xff] %vm248, %v243
        %253 = vst.msk [vmem:[%s194 + $0x20] sm:$0xff] %vm248, %v244
        %254 = vst.msk [vmem:[%s194 + $0x28] sm:$0xff] %vm248, %v245
        %255 = vst.msk [vmem:[%s194 + $0x30] sm:$0xff] %vm248, %v246
        %256 = vst.msk [vmem:[%s194 + $0x38] sm:$0xff] %vm248, %v247
        %p257 = scmp.lt.s32.totalorder %s16, 1
        %s258 = scalar_select %p257, %s16, 1
        %s259 = smul.addr %s258, 8
        %s260 = smul.addr %s259, 8
        %s261 = scalar_lea.vmem %s1, %s260
        // Predicated region
        $region67: #{attention_block.3} parent=57 // pred_check
          %p262 = pneg %p70
        $region68: #{attention_block.3} parent=57 // pred_check_branch
          %264 = sbr.rel (%p262) target = $region70
        $region69: #{attention_block.3} parent=57 // pred_region
          _
        $region70: #{attention_block.3} parent=57 // pred_fallthru
          _
      $region58: #{attention_block.3} parent=5 // pred_fallthru
        _
      %p265 = scmp.le.s32.totalorder 2, %s7
      // Predicated region
      $region71: #{attention_block.3} parent=5 // pred_check
        %p266 = pneg %p265
      $region72: #{attention_block.3} parent=5 // pred_check_branch
        %268 = sbr.rel (%p266) target = $region74
      $region73: #{attention_block.3} parent=5 // pred_region
        %s269 = ssub.s32 %s7, 2
        // Predicated region
        $region75: #{attention_block.3} parent=73 // pred_check
          %p270 = pneg %p76
        $region76: #{attention_block.3} parent=73 // pred_check_branch
          %272 = sbr.rel (%p270) target = $region78
        $region77: #{attention_block.3} parent=73 // pred_region
          %p273 = scmp.lt.s32.totalorder %s18, 1
          %s274 = scalar_select %p273, %s18, 1
          %s275 = smul.addr %s274, 8
          %s276 = smul.addr %s275, 8
          %s277 = scalar_lea.vmem %s1, %s276
        $region78: #{attention_block.3} parent=73 // pred_fallthru
          _
      $region74: #{attention_block.3} parent=5 // pred_fallthru
        _
    $region6: #{attention_block.3} parent=1 // loop_footer
      %s11 = sadd.s32 1, %s7
    $region7: #{attention_block.3} parent=1 // loop_footer_branch
      %6 = sbr.rel target = $region3
    $region8: #{attention_block.3} parent=1 // loop_exit
      _

// kernel: attention_block.4
$region0: #{attention_block.4}
  #allocation0 [shape = 'u32[]', space=smem, size = 0x4, offset = 0x4, fixed_abs, tag = 'smem constant byte address 0x4 - core index']
  #allocation1 [shape = 'u32[144,128]{1,0:T(1,128)}', space=vmem, size = 0x12000, scoped, tag = 'internal scratch']
  %s0 = inlined_call_operand.vmem [shape: f32[2,64], index: 0, kind: input, shape index: {}]
  %s1 = inlined_call_operand.vmem [shape: f32[64,4], index: 1, kind: input, shape index: {}]
  %s2 = inlined_call_operand.vmem [shape: f32[1,4], index: 2, kind: input, shape index: {}]
  %s3 = inlined_call_operand.vmem [shape: f32[4,64], index: 3, kind: input, shape index: {}]
  %s4 = inlined_call_operand.vmem [shape: f32[1,64], index: 4, kind: input, shape index: {}]
  %s5 = inlined_call_operand.vmem [shape: f32[2,64], index: 5, kind: output, shape index: {}]
  %s6 = sld [smem:[#allocation0]]
  $region30: #{attention_block.4} parent=0
    _
  %s8 = ssub.s32 1, %s6
  %s9 = scalar_select 0, %s8, %s6
  // Predicated region
  $region2: #{attention_block.4} parent=0 // pred_check
    _
  $region3: #{attention_block.4} parent=0 // pred_check_branch
    %11 = sbr.rel (0) target = $region5
  $region4: #{attention_block.4} parent=0 // pred_region
    _
  $region5: #{attention_block.4} parent=0 // pred_fallthru
    _
  // Predicated region
  $region6: #{attention_block.4} parent=0 // pred_check
    _
  $region7: #{attention_block.4} parent=0 // pred_check_branch
    %13 = sbr.rel (0) target = $region9
  $region8: #{attention_block.4} parent=0 // pred_region
    _
  $region9: #{attention_block.4} parent=0 // pred_fallthru
    _
  // Predicated region
  $region10: #{attention_block.4} parent=0 // pred_check
    _
  $region11: #{attention_block.4} parent=0 // pred_check_branch
    %15 = sbr.rel (0) target = $region13
  $region12: #{attention_block.4} parent=0 // pred_region
    _
  $region13: #{attention_block.4} parent=0 // pred_fallthru
    _
  // Predicated region
  $region14: #{attention_block.4} parent=0 // pred_check
    _
  $region15: #{attention_block.4} parent=0 // pred_check_branch
    %17 = sbr.rel (0) target = $region17
  $region16: #{attention_block.4} parent=0 // pred_region
    _
  $region17: #{attention_block.4} parent=0 // pred_fallthru
    _
  // Predicated region
  $region18: #{attention_block.4} parent=0 // pred_check
    _
  $region19: #{attention_block.4} parent=0 // pred_check_branch
    %19 = sbr.rel (0) target = $region21
  $region20: #{attention_block.4} parent=0 // pred_region
    _
  $region21: #{attention_block.4} parent=0 // pred_fallthru
    _
  %v20 = vld [vmem:[%s0] sm:$0x3]
  %v21 = vmul.f32 %v20, 0.00390625
  %v22 = vld [vmem:[%s1] sm:$0xff]
  %v23 = vld [vmem:[%s1 + $0x8] sm:$0xff]
  %v24 = vld [vmem:[%s1 + $0x10] sm:$0xff]
  %v25 = vld [vmem:[%s1 + $0x18] sm:$0xff]
  %v26 = vld [vmem:[%s1 + $0x20] sm:$0xff]
  %v27 = vld [vmem:[%s1 + $0x28] sm:$0xff]
  %v28 = vld [vmem:[%s1 + $0x30] sm:$0xff]
  %v29 = vld [vmem:[%s1 + $0x38] sm:$0xff]
  %v30 = vld [vmem:[%s2] sm:$0x1]
  %v32 = vlaneseq
  %v33 = vshrl.u32 %v32, 7
  %v34 = vsub.s32 0, %v33
  %v35 = vrot.slane %v30, %v34
  %vm37 = vcmask 523264
  %v39 = vsel %vm37, %v21, 0
  %41 = vmatprep.subr.mxu0 0.0
  %42 = vmatpush1.msra.mxu0 %v22
  %43 = vmatprep.subr.mxu0 0.0
  %44 = vmatpush1.msra.mxu0 %v23
  %45 = vmatprep.subr.mxu0 0.0
  %46 = vmatpush1.msra.mxu0 %v24
  %47 = vmatprep.subr.mxu0 0.0
  %48 = vmatpush1.msra.mxu0 %v25
  %49 = vmatprep.subr.mxu0 0.0
  %50 = vmatpush1.msra.mxu0 %v26
  %51 = vmatprep.subr.mxu0 0.0
  %52 = vmatpush1.msra.mxu0 %v27
  %53 = vmatprep.subr.mxu0 0.0
  %54 = vmatpush1.msra.mxu0 %v28
  %55 = vmatprep.subr.mxu0 0.0
  %56 = vmatpush1.msra.mxu0 %v29
  %57 = vmatprep.subr.mxu0 0.0
  %58 = vmatpush1.msra.mxu0 0.0
  %59 = vmatprep.subr.mxu0 0.0
  %60 = vmatpush1.msra.mxu0 0.0
  %61 = vmatprep.subr.mxu0 0.0
  %62 = vmatpush1.msra.mxu0 0.0
  %63 = vmatprep.subr.mxu0 0.0
  %64 = vmatpush1.msra.mxu0 0.0
  %65 = vmatprep.subr.mxu0 0.0
  %66 = vmatpush1.msra.mxu0 0.0
  %67 = vmatprep.subr.mxu0 0.0
  %68 = vmatpush1.msra.mxu0 0.0
  %69 = vmatprep.subr.mxu0 0.0
  %70 = vmatpush1.msra.mxu0 0.0
  %71 = vmatprep.subr.mxu0 0.0
  %72 = vmatpush1.msra.mxu0 0.0
  %73 = vmatprep.subr.mxu0 0.0
  %74 = vmatpush1.msra.mxu0 0.0
  %75 = vmatprep.subr.mxu0 0.0
  %76 = vmatpush1.msra.mxu0 0.0
  %77 = vmatprep.subr.mxu0 0.0
  %78 = vmatpush1.msra.mxu0 0.0
  %79 = vmatprep.subr.mxu0 0.0
  %80 = vmatpush1.msra.mxu0 0.0
  %81 = vmatprep.subr.mxu0 0.0
  %82 = vmatpush1.msra.mxu0 0.0
  %83 = vmatprep.subr.mxu0 0.0
  %84 = vmatpush1.msra.mxu0 0.0
  %85 = vmatprep.subr.mxu0 0.0
  %86 = vmatpush1.msra.mxu0 0.0
  %87 = vmatprep.subr.mxu0 0.0
  %88 = vmatpush1.msra.mxu0 0.0
  %89 = vmatprep.subr.mxu0 0.0
  %90 = vmatpush1.msra.mxu0 0.0
  %91 = vmatprep.subr.mxu0 0.0
  %92 = vmatpush1.msra.mxu0 0.0
  %93 = vmatprep.subr.mxu0 0.0
  %94 = vmatpush1.msra.mxu0 0.0
  %95 = vmatprep.subr.mxu0 0.0
  %96 = vmatpush1.msra.mxu0 0.0
  %97 = vmatprep.subr.mxu0 0.0
  %98 = vmatpush1.msra.mxu0 0.0
  %99 = vmatprep.subr.mxu0 0.0
  %100 = vmatpush1.msra.mxu0 0.0
  %101 = vmatprep.subr.mxu0 0.0
  %102 = vmatpush1.msra.mxu0 0.0
  %103 = vmatprep.subr.mxu0 0.0
  %104 = vmatpush1.msra.mxu0 0.0
  %105 = vmatprep.mubr.f32.mxu0 0.0
  %106 = vmatmul.mubr.f32.gmra.mrb[0].mxu0 %v39
  %v107 = vpop.f32.mrb[0].mxu0
  %v108 = vadd.f32 %v35, %v107
  %v109 = vpop.f32.mrb[0].mxu0
  %110 = vdwg.mxu0
  %v111 = vmax.f32 %v108, 0.0
  %v112 = vld [vmem:[%s3] sm:$0xf]
  %v113 = vld [vmem:[%s4] sm:$0x1]
  %v115 = vlaneseq
  %v116 = vshrl.u32 %v115, 7
  %v117 = vsub.s32 0, %v116
  %v118 = vrot.slane %v113, %v117
  %vm120 = vcmask 31744
  %v122 = vsel %vm120, %v111, 0
  %vm124 = vcmask 1043456
  %v126 = vsel %vm124, %v112, 0
  %128 = vmatprep.subr.mxu0 0.0
  %129 = vmatpush1.msra.mxu0 %v126
  %130 = vmatprep.subr.mxu0 0.0
  %131 = vmatpush1.msra.mxu0 0.0
  %132 = vmatprep.subr.mxu0 0.0
  %133 = vmatpush1.msra.mxu0 0.0
  %134 = vmatprep.subr.mxu0 0.0
  %135 = vmatpush1.msra.mxu0 0.0
  %136 = vmatprep.subr.mxu0 0.0
  %137 = vmatpush1.msra.mxu0 0.0
  %138 = vmatprep.subr.mxu0 0.0
  %139 = vmatpush1.msra.mxu0 0.0
  %140 = vmatprep.subr.mxu0 0.0
  %141 = vmatpush1.msra.mxu0 0.0
  %142 = vmatprep.subr.mxu0 0.0
  %143 = vmatpush1.msra.mxu0 0.0
  %144 = vmatprep.subr.mxu0 0.0
  %145 = vmatpush1.msra.mxu0 0.0
  %146 = vmatprep.subr.mxu0 0.0
  %147 = vmatpush1.msra.mxu0 0.0
  %148 = vmatprep.subr.mxu0 0.0
  %149 = vmatpush1.msra.mxu0 0.0
  %150 = vmatprep.subr.mxu0 0.0
  %151 = vmatpush1.msra.mxu0 0.0
  %152 = vmatprep.subr.mxu0 0.0
  %153 = vmatpush1.msra.mxu0 0.0
  %154 = vmatprep.subr.mxu0 0.0
  %155 = vmatpush1.msra.mxu0 0.0
  %156 = vmatprep.subr.mxu0 0.0
  %157 = vmatpush1.msra.mxu0 0.0
  %158 = vmatprep.subr.mxu0 0.0
  %159 = vmatpush1.msra.mxu0 0.0
  %160 = vmatprep.subr.mxu0 0.0
  %161 = vmatpush1.msra.mxu0 0.0
  %162 = vmatprep.subr.mxu0 0.0
  %163 = vmatpush1.msra.mxu0 0.0
  %164 = vmatprep.subr.mxu0 0.0
  %165 = vmatpush1.msra.mxu0 0.0
  %166 = vmatprep.subr.mxu0 0.0
  %167 = vmatpush1.msra.mxu0 0.0
  %168 = vmatprep.subr.mxu0 0.0
  %169 = vmatpush1.msra.mxu0 0.0
  %170 = vmatprep.subr.mxu0 0.0
  %171 = vmatpush1.msra.mxu0 0.0
  %172 = vmatprep.subr.mxu0 0.0
  %173 = vmatpush1.msra.mxu0 0.0
  %174 = vmatprep.subr.mxu0 0.0
  %175 = vmatpush1.msra.mxu0 0.0
  %176 = vmatprep.subr.mxu0 0.0
  %177 = vmatpush1.msra.mxu0 0.0
  %178 = vmatprep.subr.mxu0 0.0
  %179 = vmatpush1.msra.mxu0 0.0
  %180 = vmatprep.subr.mxu0 0.0
  %181 = vmatpush1.msra.mxu0 0.0
  %182 = vmatprep.subr.mxu0 0.0
  %183 = vmatpush1.msra.mxu0 0.0
  %184 = vmatprep.subr.mxu0 0.0
  %185 = vmatpush1.msra.mxu0 0.0
  %186 = vmatprep.subr.mxu0 0.0
  %187 = vmatpush1.msra.mxu0 0.0
  %188 = vmatprep.subr.mxu0 0.0
  %189 = vmatpush1.msra.mxu0 0.0
  %190 = vmatprep.subr.mxu0 0.0
  %191 = vmatpush1.msra.mxu0 0.0
  %192 = vmatprep.mubr.f32.mxu0 0.0
  %193 = vmatmul.mubr.f32.gmra.mrb[0].mxu0 %v122
  %v194 = vpop.f32.mrb[0].mxu0
  %v195 = vadd.f32 %v118, %v194
  %v196 = vpop.f32.mrb[0].mxu0
  %197 = vdwg.mxu0
  %v198 = vxor.u32 %v195, 2147483648
  %v199 = vmul.f32 %v198, 1.442695
  %v200 = vpow.pop %v199
  %v201 = vadd.f32 %v200, 1.0
  %v202 = vrcp.pop %v201
  %v203 = vmul.f32 1.0, %v202
  %vm204 = vcmask 517120
  %205 = vst.msk [vmem:[%s5] sm:$0x3] %vm204, %v203
  // Predicated region
  $region22: #{attention_block.4} parent=0 // pred_check
    _
  $region23: #{attention_block.4} parent=0 // pred_check_branch
    %207 = sbr.rel (0) target = $region25
  $region24: #{attention_block.4} parent=0 // pred_region
    _
  $region25: #{attention_block.4} parent=0 // pred_fallthru
    _
  // Predicated region
  $region26: #{attention_block.4} parent=0 // pred_check
    _
  $region27: #{attention_block.4} parent=0 // pred_check_branch
    %209 = sbr.rel (0) target = $region29
  $region28: #{attention_block.4} parent=0 // pred_region
    _
  $region29: #{attention_block.4} parent=0 // pred_fallthru
    _

// kernel: attention_block.5
$region0: #{attention_block.5}
  #allocation0 [shape = 'u32[]', space=smem, size = 0x4, offset = 0x4, fixed_abs, tag = 'smem constant byte address 0x4 - core index']
  #allocation1 [shape = 'u32[144,128]{1,0:T(1,128)}', space=vmem, size = 0x12000, scoped, tag = 'internal scratch']
  %s0 = inlined_call_operand.vmem [shape: f32[2,64,256], index: 0, kind: input, shape index: {}]
  %s1 = inlined_call_operand.vmem [shape: f32[2,64,1], index: 1, kind: input, shape index: {}]
  %s2 = inlined_call_operand.vmem [shape: f32[2,64,256], index: 2, kind: output, shape index: {}]
  %s3 = sld [smem:[#allocation0]]
  $region113: #{attention_block.5} parent=0
    _
  %s5 = ssub.s32 1, %s3
  %s6 = scalar_select 0, %s5, %s3
  $region1: #{attention_block.5} parent=0
    #allocation2 [shape = 'u8[65536]{0}', space=vmem, size = 0x10000, scoped, tag = 'input window, operand 0']
    #allocation3 [shape = 'u8[65536]{0}', space=vmem, size = 0x10000, scoped, tag = 'output window, operand 0']
    loop: start=0, step=1, limit=6
    $region2: #{attention_block.5} parent=1 // loop_pre_header
      _
    $region3: #{attention_block.5} parent=1 // loop_header
      %s8 = sphi 0, %s12
      %p9 = scmp.ge.s32.totalorder %s8, 6
      %s15 = sphi 0, %s27
      %s16 = sphi 0, %s23
      %s17 = sphi 0, %s15
      %s18 = sphi 0, %s16
      %s19 = sphi 0, %s17
      %s20 = sphi 0, %s18
      %s32 = sphi 0, %s34
      %s35 = sphi 0, %s32
      %s36 = sphi 0, %s35
      %s52 = sphi 0, %s36
      %s58 = sphi 0, %s60
      %s61 = sphi 0, %s58
      %s62 = sphi 0, %s61
      %s78 = sphi 0, %s62
      %s86 = sphi 0, %s88
      %s89 = sphi 0, %s86
      %s90 = sphi 0, %s89
      %s106 = sphi 0, %s90
    $region4: #{attention_block.5} parent=1 // loop_header_branch
      %11 = sbr.rel (%p9) target = $region8
    $region5: #{attention_block.5} parent=1 // loop_body
      %s13 = ssub.s32 %s8, 1
      %s14 = ssub.s32 %s8, 2
      %s21 = sadd.s32 1, %s16
      %p22 = scmp.ge.s32.totalorder %s21, 2
      %s23 = scalar_select %p22, 0, %s21
      %s24 = sadd.s32 1, %s15
      %s25 = scalar_select %p22, %s24, %s15
      %p26 = scmp.ge.s32.totalorder %s25, 2
      %s27 = scalar_select %p26, 0, %s25
      %s28 = ssub.s32 %s15, %s27
      %s29 = ssub.s32 %s16, %s23
      %s30 = sor.u32 %s28, %s29
      %p31 = scmp.eq.s32.totalorder %s30, 0
      %s33 = sadd.s32 %s32, 1
      %s34 = scalar_select %p31, %s32, %s33
      %p37 = pneg %p31
      %p38 = scmp.eq.s32.totalorder %s8, 3
      %p39 = por %p37, %p38
      %p40 = scmp.ne.s32.totalorder %s32, %s35
      %p41 = scmp.eq.s32.totalorder %s8, 0
      %p42 = por %p40, %p41
      %p43 = scmp.ne.s32.totalorder %s32, %s35
      %p44 = scmp.eq.s32.totalorder %s13, 3
      %p45 = por %p43, %p44
      %p46 = scmp.ne.s32.totalorder %s35, %s36
      %p47 = scmp.eq.s32.totalorder %s13, 0
      %p48 = por %p46, %p47
      %p49 = scmp.ne.s32.totalorder %s35, %s36
      %p50 = scmp.eq.s32.totalorder %s14, 3
      %p51 = por %p49, %p50
      %p53 = scmp.ne.s32.totalorder %s36, %s52
      %p54 = scmp.eq.s32.totalorder %s14, 0
      %p55 = por %p53, %p54
      %s56 = ssub.s32 %s15, %s27
      %p57 = scmp.eq.s32.totalorder %s56, 0
      %s59 = sadd.s32 %s58, 1
      %s60 = scalar_select %p57, %s58, %s59
      %p63 = pneg %p57
      %p64 = scmp.eq.s32.totalorder %s8, 3
      %p65 = por %p63, %p64
      %p66 = scmp.ne.s32.totalorder %s58, %s61
      %p67 = scmp.eq.s32.totalorder %s8, 0
      %p68 = por %p66, %p67
      %p69 = scmp.ne.s32.totalorder %s58, %s61
      %p70 = scmp.eq.s32.totalorder %s13, 3
      %p71 = por %p69, %p70
      %p72 = scmp.ne.s32.totalorder %s61, %s62
      %p73 = scmp.eq.s32.totalorder %s13, 0
      %p74 = por %p72, %p73
      %p75 = scmp.ne.s32.totalorder %s61, %s62
      %p76 = scmp.eq.s32.totalorder %s14, 3
      %p77 = por %p75, %p76
      %p79 = scmp.ne.s32.totalorder %s62, %s78
      %p80 = scmp.eq.s32.totalorder %s14, 0
      %p81 = por %p79, %p80
      %s82 = ssub.s32 %s15, %s27
      %s83 = ssub.s32 %s16, %s23
      %s84 = sor.u32 %s82, %s83
      %p85 = scmp.eq.s32.totalorder %s84, 0
      %s87 = sadd.s32 %s86, 1
      %s88 = scalar_select %p85, %s86, %s87
      %p91 = pneg %p85
      %p92 = scmp.eq.s32.totalorder %s8, 3
      %p93 = por %p91, %p92
      %p94 = scmp.ne.s32.totalorder %s86, %s89
      %p95 = scmp.eq.s32.totalorder %s8, 0
      %p96 = por %p94, %p95
      %p97 = scmp.ne.s32.totalorder %s86, %s89
      %p98 = scmp.eq.s32.totalorder %s13, 3
      %p99 = por %p97, %p98
      %p100 = scmp.ne.s32.totalorder %s89, %s90
      %p101 = scmp.eq.s32.totalorder %s13, 0
      %p102 = por %p100, %p101
      %p103 = scmp.ne.s32.totalorder %s89, %s90
      %p104 = scmp.eq.s32.totalorder %s14, 3
      %p105 = por %p103, %p104
      %p107 = scmp.ne.s32.totalorder %s90, %s106
      %p108 = scmp.eq.s32.totalorder %s14, 0
      %p109 = por %p107, %p108
      %p110 = scmp.le.s32.totalorder 1, %s8
      %p111 = scmp.lt.s32.totalorder %s8, 5
      %p112 = pnand %p110, %p111
      %p113 = pneg %p112
      // Predicated region
      $region9: #{attention_block.5} parent=5 // pred_check
        _
      $region10: #{attention_block.5} parent=5 // pred_check_branch
        %115 = sbr.rel (%p112) target = $region12
      $region11: #{attention_block.5} parent=5 // pred_region
        %s116 = ssub.s32 %s8, 1
      $region12: #{attention_block.5} parent=5 // pred_fallthru
        _
      %p117 = scmp.lt.s32.totalorder %s8, 4
      // Predicated region
      $region13: #{attention_block.5} parent=5 // pred_check
        %p118 = pneg %p117
      $region14: #{attention_block.5} parent=5 // pred_check_branch
        %120 = sbr.rel (%p118) target = $region16
      $region15: #{attention_block.5} parent=5 // pred_region
        // Predicated region
        $region17: #{attention_block.5} parent=15 // pred_check
          %p121 = pneg %p42
        $region18: #{attention_block.5} parent=15 // pred_check_branch
          %123 = sbr.rel (%p121) target = $region20
        $region19: #{attention_block.5} parent=15 // pred_region
          %s124 = sand.u32 %s32, 1
          %s125 = sand.u32 %s32, 1
          %s126 = smul.addr %s125, 64
          %s127 = scalar_lea.vmem [#allocation2], %s126
          %s128 = smul.addr %s15, 16
          %s129 = sadd.s32 %s16, %s128
          %s130 = smul.addr %s129, 8
          %s131 = scalar_lea.vmem %s0, %s130
          // Predicated region
          $region21: #{attention_block.5} parent=19 // pred_check
            _
          $region22: #{attention_block.5} parent=19 // pred_check_branch
            %133 = sbr.rel (0) target = $region24
          $region23: #{attention_block.5} parent=19 // pred_region
            // Predicated region
            $region25: #{attention_block.5} parent=23 // pred_check
              _
            $region26: #{attention_block.5} parent=23 // pred_check_branch
              %135 = sbr.rel (0) target = $region28
            $region27: #{attention_block.5} parent=23 // pred_region
              // Predicated region
              $region40: #{attention_block.5} parent=27 // pred_check
                _
              $region41: #{attention_block.5} parent=27 // pred_check_branch
                %164 = sbr.rel (0) target = $region43
              $region42: #{attention_block.5} parent=27 // pred_region
                loop: start=0, step=1, limit=1
                $region44: #{attention_block.5} parent=42 // loop_pre_header
                  _
                $region45: #{attention_block.5} parent=42 // loop_header
                  %s166 = sphi 0, %s170
                  %p167 = scmp.ge.s32.totalorder %s166, 1
                  %s171 = sphi %s131, %s131
                  %s172 = sphi %s127, %s127
                $region46: #{attention_block.5} parent=42 // loop_header_branch
                  %169 = sbr.rel (%p167) target = $region50
                $region47: #{attention_block.5} parent=42 // loop_body
                  %v173 = vld [vmem:[%s171] sm:$0xff]
                  %174 = vst [vmem:[%s172] sm:$0xff] %v173
                  %v175 = vld [vmem:[%s171 + $0x10] sm:$0xff]
                  %176 = vst [vmem:[%s172 + $0x8] sm:$0xff] %v175
                  %v177 = vld [vmem:[%s171 + $0x20] sm:$0xff]
                  %178 = vst [vmem:[%s172 + $0x10] sm:$0xff] %v177
                  %v179 = vld [vmem:[%s171 + $0x30] sm:$0xff]
                  %180 = vst [vmem:[%s172 + $0x18] sm:$0xff] %v179
                  %v181 = vld [vmem:[%s171 + $0x40] sm:$0xff]
                  %182 = vst [vmem:[%s172 + $0x20] sm:$0xff] %v181
                  %v183 = vld [vmem:[%s171 + $0x50] sm:$0xff]
                  %184 = vst [vmem:[%s172 + $0x28] sm:$0xff] %v183
                  %v185 = vld [vmem:[%s171 + $0x60] sm:$0xff]
                  %186 = vst [vmem:[%s172 + $0x30] sm:$0xff] %v185
                  %v187 = vld [vmem:[%s171 + $0x70] sm:$0xff]
                  %188 = vst [vmem:[%s172 + $0x38] sm:$0xff] %v187
                $region48: #{attention_block.5} parent=42 // loop_footer
                  %s170 = sadd.s32 1, %s166
                $region49: #{attention_block.5} parent=42 // loop_footer_branch
                  %165 = sbr.rel target = $region45
                $region50: #{attention_block.5} parent=42 // loop_exit
                  _
              $region43: #{attention_block.5} parent=27 // pred_fallthru
                _
              // Predicated region
              $region51: #{attention_block.5} parent=27 // pred_check
                _
              $region52: #{attention_block.5} parent=27 // pred_check_branch
                %190 = sbr.rel target = $region54
              $region53: #{attention_block.5} parent=27 // pred_region
                _
              $region54: #{attention_block.5} parent=27 // pred_fallthru
                _
            $region28: #{attention_block.5} parent=23 // pred_fallthru
              _
            // Predicated region
            $region29: #{attention_block.5} parent=23 // pred_check
              _
            $region30: #{attention_block.5} parent=23 // pred_check_branch
              %137 = sbr.rel target = $region32
            $region31: #{attention_block.5} parent=23 // pred_region
              loop: start=0, step=1, limit=1
              $region33: #{attention_block.5} parent=31 // loop_pre_header
                _
              $region34: #{attention_block.5} parent=31 // loop_header
                %s140 = sphi 0, %s144
                %p141 = scmp.ge.s32.totalorder %s140, 1
                %s145 = sphi %s131, %s131
                %s146 = sphi %s127, %s127
              $region35: #{attention_block.5} parent=31 // loop_header_branch
                %143 = sbr.rel (%p141) target = $region39
              $region36: #{attention_block.5} parent=31 // loop_body
                %v147 = vld [vmem:[%s145] sm:$0xff]
                %148 = vst [vmem:[%s146] sm:$0xff] %v147
                %v149 = vld [vmem:[%s145 + $0x10] sm:$0xff]
                %150 = vst [vmem:[%s146 + $0x8] sm:$0xff] %v149
                %v151 = vld [vmem:[%s145 + $0x20] sm:$0xff]
                %152 = vst [vmem:[%s146 + $0x10] sm:$0xff] %v151
                %v153 = vld [vmem:[%s145 + $0x30] sm:$0xff]
                %154 = vst [vmem:[%s146 + $0x18] sm:$0xff] %v153
                %v155 = vld [vmem:[%s145 + $0x40] sm:$0xff]
                %156 = vst [vmem:[%s146 + $0x20] sm:$0xff] %v155
                %v157 = vld [vmem:[%s145 + $0x50] sm:$0xff]
                %158 = vst [vmem:[%s146 + $0x28] sm:$0xff] %v157
                %v159 = vld [vmem:[%s145 + $0x60] sm:$0xff]
                %160 = vst [vmem:[%s146 + $0x30] sm:$0xff] %v159
                %v161 = vld [vmem:[%s145 + $0x70] sm:$0xff]
                %162 = vst [vmem:[%s146 + $0x38] sm:$0xff] %v161
              $region37: #{attention_block.5} parent=31 // loop_footer
                %s144 = sadd.s32 1, %s140
              $region38: #{attention_block.5} parent=31 // loop_footer_branch
                %139 = sbr.rel target = $region34
              $region39: #{attention_block.5} parent=31 // loop_exit
                _
            $region32: #{attention_block.5} parent=23 // pred_fallthru
              _
          $region24: #{attention_block.5} parent=19 // pred_fallthru
            _
          %191 = vnop
        $region20: #{attention_block.5} parent=15 // pred_fallthru
          _
        // Predicated region
        $region55: #{attention_block.5} parent=15 // pred_check
          %p192 = pneg %p68
        $region56: #{attention_block.5} parent=15 // pred_check_branch
          %194 = sbr.rel (%p192) target = $region58
        $region57: #{attention_block.5} parent=15 // pred_region
          %p195 = scmp.lt.s32.totalorder %s15, 1
          %s196 = scalar_select %p195, %s15, 1
          %s197 = smul.addr %s196, 8
          %s198 = smul.addr %s197, 8
          %s199 = scalar_lea.vmem %s1, %s198
        $region58: #{attention_block.5} parent=15 // pred_fallthru
          _
      $region16: #{attention_block.5} parent=5 // pred_fallthru
        _
      %p200 = scmp.le.s32.totalorder 1, %s8
      %p201 = scmp.lt.s32.totalorder %s8, 5
      %p202 = pnand %p200, %p201
      %p203 = pneg %p202
      // Predicated region
      $region59: #{attention_block.5} parent=5 // pred_check
        _
      $region60: #{attention_block.5} parent=5 // pred_check_branch
        %205 = sbr.rel (%p202) target = $region62
      $region61: #{attention_block.5} parent=5 // pred_region
        %s206 = ssub.s32 %s8, 1
        %s207 = sand.u32 %s35, 1
        %s208 = sand.u32 %s35, 1
        %s209 = smul.addr %s208, 64
        %s210 = scalar_lea.vmem [#allocation2], %s209
        // Predicated region
        $region63: #{attention_block.5} parent=61 // pred_check
          %p211 = pneg %p48
        $region64: #{attention_block.5} parent=61 // pred_check_branch
          %213 = sbr.rel (%p211) target = $region66
        $region65: #{attention_block.5} parent=61 // pred_region
          _
        $region66: #{attention_block.5} parent=61 // pred_fallthru
          _
        %s214 = sand.u32 %s35, 1
        %s215 = sand.u32 %s35, 1
        %s216 = smul.addr %s215, 64
        %s217 = scalar_lea.vmem [#allocation2], %s216
        %p218 = pneg %p48
        %p219 = pneg %p45
        %p220 = scmp.lt.s32.totalorder %s17, 1
        %s221 = scalar_select %p220, %s17, 1
        %s222 = smul.addr %s221, 8
        %s223 = smul.addr %s222, 8
        %s224 = scalar_lea.vmem %s1, %s223
        %p225 = pneg %p74
        %p226 = pneg %p71
        %p227 = pneg %p102
        %p228 = pneg %p99
        %s229 = sand.u32 %s89, 1
        %s230 = sand.u32 %s89, 1
        %s231 = smul.addr %s230, 64
        %s232 = scalar_lea.vmem [#allocation3], %s231
        %p233 = scmp.lt.s32.totalorder %s17, 1
        %s234 = scalar_select %p233, %s17, 1
        %s235 = smul.addr %s234, 8
        %s236 = smul.addr %s235, 8
        %s237 = scalar_lea.vmem %s1, %s236
        %v238 = vld [vmem:[%s210] sm:$0xff]
        %v239 = vld [vmem:[%s210 + $0x8] sm:$0xff]
        %v240 = vld [vmem:[%s210 + $0x10] sm:$0xff]
        %v241 = vld [vmem:[%s210 + $0x18] sm:$0xff]
        %v242 = vld [vmem:[%s210 + $0x20] sm:$0xff]
        %v243 = vld [vmem:[%s210 + $0x28] sm:$0xff]
        %v244 = vld [vmem:[%s210 + $0x30] sm:$0xff]
        %v245 = vld [vmem:[%s210 + $0x38] sm:$0xff]
        %v246 = vld [vmem:[%s237] sm:$0xff]
        %v247 = vld [vmem:[%s237 + $0x8] sm:$0xff]
        %v248 = vld [vmem:[%s237 + $0x10] sm:$0xff]
        %v249 = vld [vmem:[%s237 + $0x18] sm:$0xff]
        %v250 = vld [vmem:[%s237 + $0x20] sm:$0xff]
        %v251 = vld [vmem:[%s237 + $0x28] sm:$0xff]
        %v252 = vld [vmem:[%s237 + $0x30] sm:$0xff]
        %v253 = vld [vmem:[%s237 + $0x38] sm:$0xff]
        %255 = vset.pattern.permute.xlu0 0
        %256 = vperm.xlu0 %255, %v246
        %v257 = vpop.permute.xlu0 %256
        %260 = vset.pattern.permute.xlu0 0
        %261 = vperm.xlu0 %260, %v247
        %v262 = vpop.permute.xlu0 %261
        %265 = vset.pattern.permute.xlu0 0
        %266 = vperm.xlu0 %265, %v248
        %v267 = vpop.permute.xlu0 %266
        %270 = vset.pattern.permute.xlu0 0
        %271 = vperm.xlu0 %270, %v249
        %v272 = vpop.permute.xlu0 %271
        %275 = vset.pattern.permute.xlu0 0
        %276 = vperm.xlu0 %275, %v250
        %v277 = vpop.permute.xlu0 %276
        %280 = vset.pattern.permute.xlu0 0
        %281 = vperm.xlu0 %280, %v251
        %v282 = vpop.permute.xlu0 %281
        %285 = vset.pattern.permute.xlu0 0
        %286 = vperm.xlu0 %285, %v252
        %v287 = vpop.permute.xlu0 %286
        %290 = vset.pattern.permute.xlu0 0
        %291 = vperm.xlu0 %290, %v253
        %v292 = vpop.permute.xlu0 %291
        %v294 = vmul.f32 %v238, %v257
        %v295 = vmul.f32 %v239, %v262
        %v296 = vmul.f32 %v240, %v267
        %v297 = vmul.f32 %v241, %v272
        %v298 = vmul.f32 %v242, %v277
        %v299 = vmul.f32 %v243, %v282
        %v300 = vmul.f32 %v244, %v287
        %v301 = vmul.f32 %v245, %v292
        %302 = vst [vmem:[%s232] sm:$0xff] %v294
        %303 = vst [vmem:[%s232 + $0x8] sm:$0xff] %v295
        %304 = vst [vmem:[%s232 + $0x10] sm:$0xff] %v296
        %305 = vst [vmem:[%s232 + $0x18] sm:$0xff] %v297
        %306 = vst [vmem:[%s232 + $0x20] sm:$0xff] %v298
        %307 = vst [vmem:[%s232 + $0x28] sm:$0xff] %v299
        %308 = vst [vmem:[%s232 + $0x30] sm:$0xff] %v300
        %309 = vst [vmem:[%s232 + $0x38] sm:$0xff] %v301
        %s310 = sand.u32 %s89, 1
        %s311 = sand.u32 %s89, 1
        %s312 = smul.addr %s311, 64
        %s313 = scalar_lea.vmem [#allocation3], %s312
        // Predicated region
        $region67: #{attention_block.5} parent=61 // pred_check
          %p314 = pneg %p99
        $region68: #{attention_block.5} parent=61 // pred_check_branch
          %316 = sbr.rel (%p314) target = $region70
        $region69: #{attention_block.5} parent=61 // pred_region
          %s317 = smul.addr %s17, 16
          %s318 = sadd.s32 %s18, %s317
          %s319 = smul.addr %s318, 8
          %s320 = scalar_lea.vmem %s2, %s319
          // Predicated region
          $region71: #{attention_block.5} parent=69 // pred_check
            _
          $region72: #{attention_block.5} parent=69 // pred_check_branch
            %322 = sbr.rel (0) target = $region74
          $region73: #{attention_block.5} parent=69 // pred_region
            // Predicated region
            $region75: #{attention_block.5} parent=73 // pred_check
              _
            $region76: #{attention_block.5} parent=73 // pred_check_branch
              %324 = sbr.rel (0) target = $region78
            $region77: #{attention_block.5} parent=73 // pred_region
              // Predicated region
              $region90: #{attention_block.5} parent=77 // pred_check
                _
              $region91: #{attention_block.5} parent=77 // pred_check_branch
                %353 = sbr.rel (0) target = $region93
              $region92: #{attention_block.5} parent=77 // pred_region
                loop: start=0, step=1, limit=1
                $region94: #{attention_block.5} parent=92 // loop_pre_header
                  _
                $region95: #{attention_block.5} parent=92 // loop_header
                  %s355 = sphi 0, %s359
                  %p356 = scmp.ge.s32.totalorder %s355, 1
                  %s360 = sphi %s313, %s313
                  %s361 = sphi %s320, %s320
                $region96: #{attention_block.5} parent=92 // loop_header_branch
                  %358 = sbr.rel (%p356) target = $region100
                $region97: #{attention_block.5} parent=92 // loop_body
                  %v362 = vld [vmem:[%s360] sm:$0xff]
                  %363 = vst [vmem:[%s361] sm:$0xff] %v362
                  %v364 = vld [vmem:[%s360 + $0x8] sm:$0xff]
                  %365 = vst [vmem:[%s361 + $0x10] sm:$0xff] %v364
                  %v366 = vld [vmem:[%s360 + $0x10] sm:$0xff]
                  %367 = vst [vmem:[%s361 + $0x20] sm:$0xff] %v366
                  %v368 = vld [vmem:[%s360 + $0x18] sm:$0xff]
                  %369 = vst [vmem:[%s361 + $0x30] sm:$0xff] %v368
                  %v370 = vld [vmem:[%s360 + $0x20] sm:$0xff]
                  %371 = vst [vmem:[%s361 + $0x40] sm:$0xff] %v370
                  %v372 = vld [vmem:[%s360 + $0x28] sm:$0xff]
                  %373 = vst [vmem:[%s361 + $0x50] sm:$0xff] %v372
                  %v374 = vld [vmem:[%s360 + $0x30] sm:$0xff]
                  %375 = vst [vmem:[%s361 + $0x60] sm:$0xff] %v374
                  %v376 = vld [vmem:[%s360 + $0x38] sm:$0xff]
                  %377 = vst [vmem:[%s361 + $0x70] sm:$0xff] %v376
                $region98: #{attention_block.5} parent=92 // loop_footer
                  %s359 = sadd.s32 1, %s355
                $region99: #{attention_block.5} parent=92 // loop_footer_branch
                  %354 = sbr.rel target = $region95
                $region100: #{attention_block.5} parent=92 // loop_exit
                  _
              $region93: #{attention_block.5} parent=77 // pred_fallthru
                _
              // Predicated region
              $region101: #{attention_block.5} parent=77 // pred_check
                _
              $region102: #{attention_block.5} parent=77 // pred_check_branch
                %379 = sbr.rel target = $region104
              $region103: #{attention_block.5} parent=77 // pred_region
                _
              $region104: #{attention_block.5} parent=77 // pred_fallthru
                _
            $region78: #{attention_block.5} parent=73 // pred_fallthru
              _
            // Predicated region
            $region79: #{attention_block.5} parent=73 // pred_check
              _
            $region80: #{attention_block.5} parent=73 // pred_check_branch
              %326 = sbr.rel target = $region82
            $region81: #{attention_block.5} parent=73 // pred_region
              loop: start=0, step=1, limit=1
              $region83: #{attention_block.5} parent=81 // loop_pre_header
                _
              $region84: #{attention_block.5} parent=81 // loop_header
                %s329 = sphi 0, %s333
                %p330 = scmp.ge.s32.totalorder %s329, 1
                %s334 = sphi %s313, %s313
                %s335 = sphi %s320, %s320
              $region85: #{attention_block.5} parent=81 // loop_header_branch
                %332 = sbr.rel (%p330) target = $region89
              $region86: #{attention_block.5} parent=81 // loop_body
                %v336 = vld [vmem:[%s334] sm:$0xff]
                %337 = vst [vmem:[%s335] sm:$0xff] %v336
                %v338 = vld [vmem:[%s334 + $0x8] sm:$0xff]
                %339 = vst [vmem:[%s335 + $0x10] sm:$0xff] %v338
                %v340 = vld [vmem:[%s334 + $0x10] sm:$0xff]
                %341 = vst [vmem:[%s335 + $0x20] sm:$0xff] %v340
                %v342 = vld [vmem:[%s334 + $0x18] sm:$0xff]
                %343 = vst [vmem:[%s335 + $0x30] sm:$0xff] %v342
                %v344 = vld [vmem:[%s334 + $0x20] sm:$0xff]
                %345 = vst [vmem:[%s335 + $0x40] sm:$0xff] %v344
                %v346 = vld [vmem:[%s334 + $0x28] sm:$0xff]
                %347 = vst [vmem:[%s335 + $0x50] sm:$0xff] %v346
                %v348 = vld [vmem:[%s334 + $0x30] sm:$0xff]
                %349 = vst [vmem:[%s335 + $0x60] sm:$0xff] %v348
                %v350 = vld [vmem:[%s334 + $0x38] sm:$0xff]
                %351 = vst [vmem:[%s335 + $0x70] sm:$0xff] %v350
              $region87: #{attention_block.5} parent=81 // loop_footer
                %s333 = sadd.s32 1, %s329
              $region88: #{attention_block.5} parent=81 // loop_footer_branch
                %328 = sbr.rel target = $region84
              $region89: #{attention_block.5} parent=81 // loop_exit
                _
            $region82: #{attention_block.5} parent=73 // pred_fallthru
              _
          $region74: #{attention_block.5} parent=69 // pred_fallthru
            _
          %380 = vnop
        $region70: #{attention_block.5} parent=61 // pred_fallthru
          _
      $region62: #{attention_block.5} parent=5 // pred_fallthru
        _
      %p381 = scmp.le.s32.totalorder 2, %s8
      // Predicated region
      $region105: #{attention_block.5} parent=5 // pred_check
        %p382 = pneg %p381
      $region106: #{attention_block.5} parent=5 // pred_check_branch
        %384 = sbr.rel (%p382) target = $region108
      $region107: #{attention_block.5} parent=5 // pred_region
        %s385 = ssub.s32 %s8, 2
        // Predicated region
        $region109: #{attention_block.5} parent=107 // pred_check
          %p386 = pneg %p105
        $region110: #{attention_block.5} parent=107 // pred_check_branch
          %388 = sbr.rel (%p386) target = $region112
        $region111: #{attention_block.5} parent=107 // pred_region
          %s389 = sand.u32 %s90, 1
          %s390 = sand.u32 %s90, 1
          %s391 = smul.addr %s390, 64
          %s392 = scalar_lea.vmem [#allocation3], %s391
        $region112: #{attention_block.5} parent=107 // pred_fallthru
          _
      $region108: #{attention_block.5} parent=5 // pred_fallthru
        _
    $region6: #{attention_block.5} parent=1 // loop_footer
      %s12 = sadd.s32 1, %s8
    $region7: #{attention_block.5} parent=1 // loop_footer_branch
      %7 = sbr.rel target = $region3
    $region8: #{attention_block.5} parent=1 // loop_exit
      _

</llo_original>
